<compile_context>
chip_gen: v6e
topology: v6e:2x2x1
jax: 0.10.0
libtpu: 0.0.40
codegen_flags: <defaults>
</compile_context>

<pallas_src>
import functools

import jax
import jax.numpy as jnp
from jax.experimental import pallas as pl
from jax.experimental.pallas import tpu as pltpu


def _round_up(n, m):
    return (n + m - 1) // m * m


def _mlp_kernel(x_ref, w1_ref, b1_ref, w2_ref, b2_ref, o_ref):
    # fc1 + relu  (all f32; MXU accumulates in f32)
    h1 = jnp.dot(x_ref[...], w1_ref[...], preferred_element_type=jnp.float32)
    h1 = jnp.maximum(h1 + b1_ref[...], 0.0)
    # fc2 + relu
    h2 = jnp.dot(h1, w2_ref[...], preferred_element_type=jnp.float32)
    h2 = jnp.maximum(h2 + b2_ref[...], 0.0)
    o_ref[...] = h2.astype(o_ref.dtype)


# Batch threshold above which we tile over the batch dimension.
_BATCH_TILE = 512


@jax.jit
def subnetwork_forward(x, w1, b1, w2, b2):
    """x: (B, D_in) f32, w1: (D_in, H), b1: (1, H), w2: (H, H), b2: (1, H) -> (B, H) f32."""
    B, d_in = x.shape
    H = w1.shape[1]

    # Pad feature dims to lane/sublane friendly sizes (zeros keep math exact).
    Dp = _round_up(d_in, 8)      # 3 -> 8
    Hp = _round_up(H, 128)       # 100 -> 128

    xp = jnp.pad(x, ((0, 0), (0, Dp - d_in)))
    w1p = jnp.pad(w1, ((0, Dp - d_in), (0, Hp - H)))
    b1p = jnp.pad(b1, ((0, 0), (0, Hp - H)))
    w2p = jnp.pad(w2, ((0, Hp - H), (0, Hp - H)))
    b2p = jnp.pad(b2, ((0, 0), (0, Hp - H)))

    f32_bytes = 4
    cost = pl.CostEstimate(
        flops=2 * B * (Dp * Hp + Hp * Hp),
        transcendentals=0,
        bytes_accessed=f32_bytes * (B * Dp + Dp * Hp + Hp + Hp * Hp + Hp + B * Hp),
    )

    if B <= _BATCH_TILE:
        # Whole problem (< ~100 KB padded) fits in VMEM: no grid, no pipeline.
        vmem_spec = pl.BlockSpec(memory_space=pltpu.MemorySpace.VMEM)
        out_p = pl.pallas_call(
            _mlp_kernel,
            out_shape=jax.ShapeDtypeStruct((B, Hp), jnp.float32),
            in_specs=[vmem_spec] * 5,
            out_specs=vmem_spec,
            cost_estimate=cost,
        )(xp, w1p, b1p, w2p, b2p)
    else:
        # Large batch: tile only over B; weights/biases stay resident in VMEM.
        tm = _BATCH_TILE
        Bp = _round_up(B, tm)
        xp = jnp.pad(xp, ((0, Bp - B), (0, 0)))
        const = lambda shape: pl.BlockSpec(shape, lambda i: (0, 0))
        out_p = pl.pallas_call(
            _mlp_kernel,
            out_shape=jax.ShapeDtypeStruct((Bp, Hp), jnp.float32),
            grid_spec=pltpu.PrefetchScalarGridSpec(
                num_scalar_prefetch=0,
                grid=(Bp // tm,),
                in_specs=[
                    pl.BlockSpec((tm, Dp), lambda i: (i, 0)),
                    const((Dp, Hp)),
                    const((1, Hp)),
                    const((Hp, Hp)),
                    const((1, Hp)),
                ],
                out_specs=pl.BlockSpec((tm, Hp), lambda i: (i, 0)),
            ),
            compiler_params=pltpu.CompilerParams(
                dimension_semantics=("parallel",),
            ),
            cost_estimate=cost,
        )(xp, w1p, b1p, w2p, b2p)
        out_p = out_p[:B]

    # Slice padded lanes back off.
    return out_p[:, :H]


def init_params(key, input_dim=3, hidden_dim=100):
    """Deterministic init mimicking nn.Linear's default U(-1/sqrt(fan_in), 1/sqrt(fan_in)).

    Weights are returned already transposed to (in_features, out_features)."""
    k1, k2, k3, k4 = jax.random.split(key, 4)
    bnd1 = 1.0 / jnp.sqrt(jnp.float32(input_dim))
    bnd2 = 1.0 / jnp.sqrt(jnp.float32(hidden_dim))
    w1 = jax.random.uniform(k1, (input_dim, hidden_dim), jnp.float32, -bnd1, bnd1)
    b1 = jax.random.uniform(k2, (1, hidden_dim), jnp.float32, -bnd1, bnd1)
    w2 = jax.random.uniform(k3, (hidden_dim, hidden_dim), jnp.float32, -bnd2, bnd2)
    b2 = jax.random.uniform(k4, (1, hidden_dim), jnp.float32, -bnd2, bnd2)
    return w1, b1, w2, b2


def reference_forward(x, w1, b1, w2, b2):
    h = jnp.maximum(x @ w1 + b1, 0.0)
    return jnp.maximum(h @ w2 + b2, 0.0)


if __name__ == "__main__":
    key = jax.random.PRNGKey(0)
    kx, kp = jax.random.split(key)

    input_dim, hidden_dim, batch = 3, 100, 8
    x = jax.random.normal(kx, (batch, input_dim), jnp.float32)
    w1, b1, w2, b2 = init_params(kp, input_dim, hidden_dim)

    out = subnetwork_forward(x, w1, b1, w2, b2)
    out = jax.block_until_ready(out)

    ref = reference_forward(x, w1, b1, w2, b2)
    assert out.shape == (batch, hidden_dim)
    assert jnp.allclose(out, ref, atol=1e-5, rtol=1e-5), "mismatch vs reference"

    print("KERNEL_OK")
</pallas_src>

<mosaic_0001>
module attributes {stable_mosaic.version = 11 : i64} {
  func.func @_mlp_kernel(%arg0: memref<8x8xf32, #tpu.memory_space<vmem>>, %arg1: memref<8x128xf32, #tpu.memory_space<vmem>>, %arg2: memref<1x128xf32, #tpu.memory_space<vmem>>, %arg3: memref<128x128xf32, #tpu.memory_space<vmem>>, %arg4: memref<1x128xf32, #tpu.memory_space<vmem>>, %arg5: memref<8x128xf32, #tpu.memory_space<vmem>>) attributes {dimension_semantics = [], scalar_prefetch = 0 : i64, scratch_operands = 0 : i64, tpu.core_type = #tpu.core_type<tc>} {
    %c0 = arith.constant 0 : index
    %c0_0 = arith.constant 0 : index
    %0 = vector.load %arg0[%c0, %c0_0] : memref<8x8xf32, #tpu.memory_space<vmem>>, vector<8x8xf32>
    %c0_1 = arith.constant 0 : index
    %c0_2 = arith.constant 0 : index
    %1 = vector.load %arg1[%c0_1, %c0_2] : memref<8x128xf32, #tpu.memory_space<vmem>>, vector<8x128xf32>
    %cst = arith.constant dense<0.000000e+00> : vector<8x128xf32>
    %2 = tpu.matmul %0, %1, %cst {dimension_numbers = #tpu.dot_dimension_numbers<[1], [0], [0], [1], [0, 0, 1, 1], [], []>} : vector<8x8xf32>, vector<8x128xf32>, vector<8x128xf32> -> vector<8x128xf32>
    %c0_3 = arith.constant 0 : index
    %c0_4 = arith.constant 0 : index
    %3 = vector.load %arg2[%c0_3, %c0_4] : memref<1x128xf32, #tpu.memory_space<vmem>>, vector<1x128xf32>
    %4 = vector.broadcast %3 : vector<1x128xf32> to vector<8x128xf32>
    %5 = arith.addf %2, %4 : vector<8x128xf32>
    %cst_5 = arith.constant 0.000000e+00 : f32
    %6 = vector.broadcast %cst_5 : f32 to vector<8x128xf32>
    %7 = arith.maximumf %5, %6 : vector<8x128xf32>
    %c0_6 = arith.constant 0 : index
    %c0_7 = arith.constant 0 : index
    %8 = vector.load %arg3[%c0_6, %c0_7] : memref<128x128xf32, #tpu.memory_space<vmem>>, vector<128x128xf32>
    %cst_8 = arith.constant dense<0.000000e+00> : vector<8x128xf32>
    %9 = tpu.matmul %7, %8, %cst_8 {dimension_numbers = #tpu.dot_dimension_numbers<[1], [0], [0], [1], [0, 0, 1, 1], [], []>} : vector<8x128xf32>, vector<128x128xf32>, vector<8x128xf32> -> vector<8x128xf32>
    %c0_9 = arith.constant 0 : index
    %c0_10 = arith.constant 0 : index
    %10 = vector.load %arg4[%c0_9, %c0_10] : memref<1x128xf32, #tpu.memory_space<vmem>>, vector<1x128xf32>
    %11 = vector.broadcast %10 : vector<1x128xf32> to vector<8x128xf32>
    %12 = arith.addf %9, %11 : vector<8x128xf32>
    %cst_11 = arith.constant 0.000000e+00 : f32
    %13 = vector.broadcast %cst_11 : f32 to vector<8x128xf32>
    %14 = arith.maximumf %12, %13 : vector<8x128xf32>
    %c0_12 = arith.constant 0 : index
    %c0_13 = arith.constant 0 : index
    %15 = vector.load %arg5[%c0_12, %c0_13] : memref<8x128xf32, #tpu.memory_space<vmem>>, vector<8x128xf32>
    tpu.vector_store %arg5[%c0_12, %c0_13], %14 {strides = array<i32>} : memref<8x128xf32, #tpu.memory_space<vmem>>, vector<8x128xf32>,
    return
  }
}

</mosaic_0001>

<llo_original>
// kernel: subnetwork_forward.1
$region0: #{subnetwork_forward.1}
  #allocation0 [shape = 'u32[]', space=smem, size = 0x4, offset = 0x4, fixed_abs, tag = 'smem constant byte address 0x4 - core index']
  #allocation1 [shape = 'u32[144,128]{1,0:T(1,128)}', space=vmem, size = 0x12000, scoped, tag = 'internal scratch']
  %s0 = inlined_call_operand.vmem [shape: f32[8,8], index: 0, kind: input, shape index: {}]
  %s1 = inlined_call_operand.vmem [shape: f32[8,128], index: 1, kind: input, shape index: {}]
  %s2 = inlined_call_operand.vmem [shape: f32[1,128], index: 2, kind: input, shape index: {}]
  %s3 = inlined_call_operand.vmem [shape: f32[128,128], index: 3, kind: input, shape index: {}]
  %s4 = inlined_call_operand.vmem [shape: f32[1,128], index: 4, kind: input, shape index: {}]
  %s5 = inlined_call_operand.hbm [shape: f32[8,128], index: 5, kind: output, shape index: {}]
  %s6 = sld [smem:[#allocation0]]
  $region30: #{subnetwork_forward.1} parent=0
    _
  %s8 = ssub.s32 1, %s6
  %s9 = scalar_select 0, %s8, %s6
  $region1: #{subnetwork_forward.1} parent=0
    #allocation2 [shape = 'u8[4096]{0}', space=vmem, size = 0x1000, scoped, tag = 'output window, operand 0, single buffered']
    #allocation3 [shape = 's32[1]{0}', space=sflag, size = 0x4, scoped, tag = 'scoped memory for subnetwork_forward.1']
    %10 = vsyncpa [#allocation3], 0
    // Predicated region
    $region2: #{subnetwork_forward.1} parent=1 // pred_check
      _
    $region3: #{subnetwork_forward.1} parent=1 // pred_check_branch
      %12 = sbr.rel (0) target = $region5
    $region4: #{subnetwork_forward.1} parent=1 // pred_region
      _
    $region5: #{subnetwork_forward.1} parent=1 // pred_fallthru
      _
    // Predicated region
    $region6: #{subnetwork_forward.1} parent=1 // pred_check
      _
    $region7: #{subnetwork_forward.1} parent=1 // pred_check_branch
      %14 = sbr.rel (0) target = $region9
    $region8: #{subnetwork_forward.1} parent=1 // pred_region
      _
    $region9: #{subnetwork_forward.1} parent=1 // pred_fallthru
      _
    // Predicated region
    $region10: #{subnetwork_forward.1} parent=1 // pred_check
      _
    $region11: #{subnetwork_forward.1} parent=1 // pred_check_branch
      %16 = sbr.rel (0) target = $region13
    $region12: #{subnetwork_forward.1} parent=1 // pred_region
      _
    $region13: #{subnetwork_forward.1} parent=1 // pred_fallthru
      _
    // Predicated region
    $region14: #{subnetwork_forward.1} parent=1 // pred_check
      _
    $region15: #{subnetwork_forward.1} parent=1 // pred_check_branch
      %18 = sbr.rel (0) target = $region17
    $region16: #{subnetwork_forward.1} parent=1 // pred_region
      _
    $region17: #{subnetwork_forward.1} parent=1 // pred_fallthru
      _
    // Predicated region
    $region18: #{subnetwork_forward.1} parent=1 // pred_check
      _
    $region19: #{subnetwork_forward.1} parent=1 // pred_check_branch
      %20 = sbr.rel (0) target = $region21
    $region20: #{subnetwork_forward.1} parent=1 // pred_region
      _
    $region21: #{subnetwork_forward.1} parent=1 // pred_fallthru
      _
    %v21 = vld [vmem:[%s0] sm:$0xff]
    %v22 = vld [vmem:[%s1] sm:$0xff]
    %v23 = vld [vmem:[%s2] sm:$0x1]
    %v25 = vlaneseq
    %v26 = vshrl.u32 %v25, 7
    %v27 = vsub.s32 0, %v26
    %v28 = vrot.slane %v23, %v27
    %vm30 = vcmask 64512
    %v32 = vsel %vm30, %v21, 0
    %34 = vmatprep.subr.mxu0 0.0
    %35 = vmatpush1.msra.mxu0 0.0
    %36 = vmatprep.subr.mxu0 0.0
    %37 = vmatpush1.msra.mxu0 0.0
    %38 = vmatprep.subr.mxu0 0.0
    %39 = vmatpush1.msra.mxu0 0.0
    %40 = vmatprep.subr.mxu0 0.0
    %41 = vmatpush1.msra.mxu0 0.0
    %42 = vmatprep.subr.mxu0 0.0
    %43 = vmatpush1.msra.mxu0 0.0
    %44 = vmatprep.subr.mxu0 0.0
    %45 = vmatpush1.msra.mxu0 0.0
    %46 = vmatprep.subr.mxu0 0.0
    %47 = vmatpush1.msra.mxu0 0.0
    %48 = vmatprep.subr.mxu0 0.0
    %49 = vmatpush1.msra.mxu0 0.0
    %50 = vmatprep.subr.mxu0 0.0
    %51 = vmatpush1.msra.mxu0 0.0
    %52 = vmatprep.subr.mxu0 0.0
    %53 = vmatpush1.msra.mxu0 0.0
    %54 = vmatprep.subr.mxu0 0.0
    %55 = vmatpush1.msra.mxu0 0.0
    %56 = vmatprep.subr.mxu0 0.0
    %57 = vmatpush1.msra.mxu0 0.0
    %58 = vmatprep.subr.mxu0 0.0
    %59 = vmatpush1.msra.mxu0 0.0
    %60 = vmatprep.subr.mxu0 0.0
    %61 = vmatpush1.msra.mxu0 0.0
    %62 = vmatprep.subr.mxu0 0.0
    %63 = vmatpush1.msra.mxu0 0.0
    %64 = vmatprep.subr.mxu0 0.0
    %65 = vmatpush1.msra.mxu0 %v22
    %66 = vmatprep.subr.mxu0 0.0
    %67 = vmatpush2.msra.mxu0 0.0
    %68 = vmatprep.subr.mxu0 0.0
    %69 = vmatpush2.msra.mxu0 0.0
    %70 = vmatprep.subr.mxu0 0.0
    %71 = vmatpush2.msra.mxu0 0.0
    %72 = vmatprep.subr.mxu0 0.0
    %73 = vmatpush2.msra.mxu0 0.0
    %74 = vmatprep.subr.mxu0 0.0
    %75 = vmatpush2.msra.mxu0 0.0
    %76 = vmatprep.subr.mxu0 0.0
    %77 = vmatpush2.msra.mxu0 0.0
    %78 = vmatprep.subr.mxu0 0.0
    %79 = vmatpush2.msra.mxu0 0.0
    %80 = vmatprep.subr.mxu0 0.0
    %81 = vmatpush2.msra.mxu0 0.0
    %82 = vmatprep.subr.mxu0 0.0
    %83 = vmatpush2.msra.mxu0 0.0
    %84 = vmatprep.subr.mxu0 0.0
    %85 = vmatpush2.msra.mxu0 0.0
    %86 = vmatprep.subr.mxu0 0.0
    %87 = vmatpush2.msra.mxu0 0.0
    %88 = vmatprep.subr.mxu0 0.0
    %89 = vmatpush2.msra.mxu0 0.0
    %90 = vmatprep.subr.mxu0 0.0
    %91 = vmatpush2.msra.mxu0 0.0
    %92 = vmatprep.subr.mxu0 0.0
    %93 = vmatpush2.msra.mxu0 0.0
    %94 = vmatprep.subr.mxu0 0.0
    %95 = vmatpush2.msra.mxu0 0.0
    %96 = vmatprep.subr.mxu0 0.0
    %97 = vmatpush2.msra.mxu0 0.0
    %98 = vmatprep.mubr.f32.mxu0 0.0
    %99 = vmatmul.mubr.f32.gmra.mxu0 %v32
    %v100 = vpop.f32.mrf.mxu0
    %v101 = vadd.f32 %v28, %v100
    %v102 = vpop.f32.mrf.mxu0
    %103 = vdwg.mxu0
    %v104 = vmax.f32 %v101, 0.0
    %v105 = vld [vmem:[%s3] sm:$0xff]
    %v106 = vld [vmem:[%s3 + $0x8] sm:$0xff]
    %v107 = vld [vmem:[%s3 + $0x10] sm:$0xff]
    %v108 = vld [vmem:[%s3 + $0x18] sm:$0xff]
    %v109 = vld [vmem:[%s3 + $0x20] sm:$0xff]
    %v110 = vld [vmem:[%s3 + $0x28] sm:$0xff]
    %v111 = vld [vmem:[%s3 + $0x30] sm:$0xff]
    %v112 = vld [vmem:[%s3 + $0x38] sm:$0xff]
    %v113 = vld [vmem:[%s3 + $0x40] sm:$0xff]
    %v114 = vld [vmem:[%s3 + $0x48] sm:$0xff]
    %v115 = vld [vmem:[%s3 + $0x50] sm:$0xff]
    %v116 = vld [vmem:[%s3 + $0x58] sm:$0xff]
    %v117 = vld [vmem:[%s3 + $0x60] sm:$0xff]
    %v118 = vld [vmem:[%s3 + $0x68] sm:$0xff]
    %v119 = vld [vmem:[%s3 + $0x70] sm:$0xff]
    %v120 = vld [vmem:[%s3 + $0x78] sm:$0xff]
    %v121 = vld [vmem:[%s4] sm:$0x1]
    %v123 = vlaneseq
    %v124 = vshrl.u32 %v123, 7
    %v125 = vsub.s32 0, %v124
    %v126 = vrot.slane %v121, %v125
    %128 = vmatprep.subr.mxu0 0.0
    %129 = vmatpush1.msra.mxu0 %v120
    %130 = vmatprep.subr.mxu0 0.0
    %131 = vmatpush1.msra.mxu0 %v119
    %132 = vmatprep.subr.mxu0 0.0
    %133 = vmatpush1.msra.mxu0 %v118
    %134 = vmatprep.subr.mxu0 0.0
    %135 = vmatpush1.msra.mxu0 %v117
    %136 = vmatprep.subr.mxu0 0.0
    %137 = vmatpush1.msra.mxu0 %v116
    %138 = vmatprep.subr.mxu0 0.0
    %139 = vmatpush1.msra.mxu0 %v115
    %140 = vmatprep.subr.mxu0 0.0
    %141 = vmatpush1.msra.mxu0 %v114
    %142 = vmatprep.subr.mxu0 0.0
    %143 = vmatpush1.msra.mxu0 %v113
    %144 = vmatprep.subr.mxu0 0.0
    %145 = vmatpush1.msra.mxu0 %v112
    %146 = vmatprep.subr.mxu0 0.0
    %147 = vmatpush1.msra.mxu0 %v111
    %148 = vmatprep.subr.mxu0 0.0
    %149 = vmatpush1.msra.mxu0 %v110
    %150 = vmatprep.subr.mxu0 0.0
    %151 = vmatpush1.msra.mxu0 %v109
    %152 = vmatprep.subr.mxu0 0.0
    %153 = vmatpush1.msra.mxu0 %v108
    %154 = vmatprep.subr.mxu0 0.0
    %155 = vmatpush1.msra.mxu0 %v107
    %156 = vmatprep.subr.mxu0 0.0
    %157 = vmatpush1.msra.mxu0 %v106
    %158 = vmatprep.subr.mxu0 0.0
    %159 = vmatpush1.msra.mxu0 %v105
    %160 = vmatprep.subr.mxu0 0.0
    %161 = vmatpush2.msra.mxu0 0.0
    %162 = vmatprep.subr.mxu0 0.0
    %163 = vmatpush2.msra.mxu0 0.0
    %164 = vmatprep.subr.mxu0 0.0
    %165 = vmatpush2.msra.mxu0 0.0
    %166 = vmatprep.subr.mxu0 0.0
    %167 = vmatpush2.msra.mxu0 0.0
    %168 = vmatprep.subr.mxu0 0.0
    %169 = vmatpush2.msra.mxu0 0.0
    %170 = vmatprep.subr.mxu0 0.0
    %171 = vmatpush2.msra.mxu0 0.0
    %172 = vmatprep.subr.mxu0 0.0
    %173 = vmatpush2.msra.mxu0 0.0
    %174 = vmatprep.subr.mxu0 0.0
    %175 = vmatpush2.msra.mxu0 0.0
    %176 = vmatprep.subr.mxu0 0.0
    %177 = vmatpush2.msra.mxu0 0.0
    %178 = vmatprep.subr.mxu0 0.0
    %179 = vmatpush2.msra.mxu0 0.0
    %180 = vmatprep.subr.mxu0 0.0
    %181 = vmatpush2.msra.mxu0 0.0
    %182 = vmatprep.subr.mxu0 0.0
    %183 = vmatpush2.msra.mxu0 0.0
    %184 = vmatprep.subr.mxu0 0.0
    %185 = vmatpush2.msra.mxu0 0.0
    %186 = vmatprep.subr.mxu0 0.0
    %187 = vmatpush2.msra.mxu0 0.0
    %188 = vmatprep.subr.mxu0 0.0
    %189 = vmatpush2.msra.mxu0 0.0
    %190 = vmatprep.subr.mxu0 0.0
    %191 = vmatpush2.msra.mxu0 0.0
    %192 = vmatprep.mubr.f32.mxu0 0.0
    %193 = vmatmul.mubr.f32.gmra.mxu0 %v104
    %v194 = vpop.f32.mrf.mxu0
    %v195 = vadd.f32 %v126, %v194
    %v196 = vpop.f32.mrf.mxu0
    %197 = vdwg.mxu0
    %v198 = vmax.f32 %v195, 0.0
    %199 = vst [vmem:[#allocation2] sm:$0xff] %v198
    // Predicated region
    $region22: #{subnetwork_forward.1} parent=1 // pred_check
      _
    $region23: #{subnetwork_forward.1} parent=1 // pred_check_branch
      %201 = sbr.rel (0) target = $region25
    $region24: #{subnetwork_forward.1} parent=1 // pred_region
      %s203 = ssub.s32 128, 128
      %204 = vsyncadd [#allocation3], %s203
      %s206 = sshll.u32 [#allocation2], 4
      %s207 = int_to_ptr.vmem [resolvable:$true] %s206
      %209 = dma.vmem_to_hbm [thread:$0]  %s207, 128, %s5, [#allocation3]
    $region25: #{subnetwork_forward.1} parent=1 // pred_fallthru
      _
    // Predicated region
    $region26: #{subnetwork_forward.1} parent=1 // pred_check
      _
    $region27: #{subnetwork_forward.1} parent=1 // pred_check_branch
      %211 = sbr.rel (0) target = $region29
    $region28: #{subnetwork_forward.1} parent=1 // pred_region
      %212 = dma.done [#allocation3], 128
    $region29: #{subnetwork_forward.1} parent=1 // pred_fallthru
      _
    %213 = vsyncpa [#allocation3], 1

</llo_original>
